<compile_context>
chip_gen: v5e
topology: v5e:2x2
jax: 0.10.0
libtpu: 0.0.40
codegen_flags: <defaults>
</compile_context>

<pallas_src>
import jax
import jax.numpy as jnp
from jax.experimental import pallas as pl
from jax.experimental.pallas import tpu as pltpu


def ffn_kernel(x_ref, w1_ref, b1_ref, w2_ref, b2_ref, o_ref, acc_ref):
    # x_ref:  (tm, Hp)   input row tile (constant across the pf axis)
    # w1_ref: (Hp, tp)   W1 pf-block (streamed)
    # b1_ref: (1, tp)    f32 bias pf-block
    # w2_ref: (tp, Hp)   W2 pf-block (streamed)
    # b2_ref: (1, Hp)    f32 bias (resident)
    # o_ref:  (tm, Hp)   output row tile (same block across the pf axis)
    # acc_ref:(tm, Hp)   f32 accumulator scratch
    k = pl.program_id(1)

    @pl.when(k == 0)
    def _():
        acc_ref[...] = jnp.zeros_like(acc_ref)

    # First matmul: f32 accumulation on the MXU; bias add + ReLU in f32 on the
    # VPU (v5e has no bf16 elementwise path).  The activation is cast back to
    # the matmul input dtype (bf16 on the fast path) before the second dot so
    # any compiler staging/spill of it is half-width.
    h = jnp.dot(x_ref[...], w1_ref[...], preferred_element_type=jnp.float32)
    h = jnp.maximum(h + b1_ref[...], 0.0).astype(w2_ref.dtype)

    # Second matmul: accumulate this pf-block's contribution in f32.
    acc_ref[...] += jnp.dot(h, w2_ref[...], preferred_element_type=jnp.float32)

    @pl.when(k == pl.num_programs(1) - 1)
    def _():
        o_ref[...] = (acc_ref[...] + b2_ref[...]).astype(o_ref.dtype)


def _round_up(a, b):
    return (a + b - 1) // b * b


def _vmem_need_bytes(tm, Hp, tp, ib, ob):
    """Estimated VMEM footprint of one pipelined step (double-buffered)."""
    return (2 * tm * Hp * ib            # x tiles
            + 2 * tm * Hp * ob          # out tiles
            + 2 * Hp * tp * ib          # W1 blocks
            + 2 * tp * Hp * ib          # W2 blocks
            + 2 * (tp + Hp) * 4         # biases (f32)
            + tm * Hp * 4               # f32 accumulator scratch
            + tm * tp * (4 + ib)        # staged intermediate activation
            + (6 << 20))                # compiler headroom


def _vmem_cap_bytes():
    """Per-generation VMEM budget (leave headroom for compiler temporaries)."""
    cap = 64 << 20  # conservative default == v7x per-TC VMEM
    try:
        cap = int(pltpu.get_tpu_info().vmem_capacity_bytes)
    except Exception:
        pass  # hardware query unavailable (e.g. interpret mode): keep default
    return max(32 << 20, cap - (12 << 20))


def _build_ffn_call(Mp, Hp, Pp, tm, tp, out_dtype, vmem_limit):
    return pl.pallas_call(
        ffn_kernel,
        out_shape=jax.ShapeDtypeStruct((Mp, Hp), out_dtype),
        grid_spec=pltpu.PrefetchScalarGridSpec(
            num_scalar_prefetch=0,
            # pf (reduction) axis last / innermost; rows are independent.
            grid=(Mp // tm, Pp // tp),
            in_specs=[
                pl.BlockSpec((tm, Hp), lambda i, k: (i, 0)),   # x row tile
                pl.BlockSpec((Hp, tp), lambda i, k: (0, k)),   # W1 pf-block
                pl.BlockSpec((1, tp), lambda i, k: (0, k)),    # b1 pf-block
                pl.BlockSpec((tp, Hp), lambda i, k: (k, 0)),   # W2 pf-block
                pl.BlockSpec((1, Hp), lambda i, k: (0, 0)),    # b2 (resident)
            ],
            out_specs=pl.BlockSpec((tm, Hp), lambda i, k: (i, 0)),
            scratch_shapes=[pltpu.VMEM((tm, Hp), jnp.float32)],
        ),
        compiler_params=pltpu.CompilerParams(
            dimension_semantics=("parallel", "arbitrary"),
            vmem_limit_bytes=vmem_limit,
        ),
    )


def positionwise_feedforward(x, w1, b1, w2, b2, *, compute_dtype=None, tm=None, tp=None):
    """x: (B, S, H); w1: (H, P); b1: (P,); w2: (P, H); b2: (H,). Returns (B, S, H)."""
    B, S, H = x.shape
    P = w1.shape[1]
    out_dtype = x.dtype

    # Matmul-input dtype: bf16 by default (MXU fast path on all generations);
    # pass compute_dtype=jnp.float32 explicitly for the slower full-f32 path.
    # Accumulation / bias / ReLU are always f32.
    if compute_dtype is None:
        cdt = jnp.dtype(jnp.bfloat16) if x.dtype == jnp.float32 else jnp.dtype(x.dtype)
    else:
        cdt = jnp.dtype(compute_dtype)
    ib = cdt.itemsize
    ob = jnp.dtype(out_dtype).itemsize
    # Dtype-native sublane multiple (packed sublanes for sub-32-bit dtypes).
    sub = 8 if ib >= 4 else (16 if ib == 2 else 32)

    M = B * S
    # Lane-dense channel dims (multiples of 128): full MXU passes, unmasked stores.
    Hp = _round_up(H, 128)

    # pf-dim tile: bounds resident weight VMEM independent of P.
    TP_MAX = 512
    Pp = _round_up(P, 128)
    if tp is None:
        tp = Pp if Pp <= TP_MAX else TP_MAX
    Pp = _round_up(Pp, tp)

    if tm is None:
        if M >= 1024:
            # Big row tiles amortize the ~0.35us/step pipeline overhead and
            # leave >= 2 "parallel" steps for megacore sharding.
            tm = 512
        else:
            # Megacore-aware: target >= 2 row steps so both v7x TensorCores
            # get work even for small M.
            tm = max(sub, min(512, _round_up((M + 1) // 2, sub)))
    else:
        tm = max(sub, _round_up(tm, sub))

    # Guard: shrink the row tile until the estimated footprint fits this
    # generation's VMEM budget (key for v7x's 64 MiB/TC).
    cap = _vmem_cap_bytes()
    while tm > sub and _vmem_need_bytes(tm, Hp, tp, ib, ob) > cap:
        tm = max(sub, _round_up(tm // 2, sub))
    Mp = _round_up(M, tm)

    # Zero padding only when needed (padded rows/cols contribute nothing and
    # are sliced off below); .astype is a no-op when dtypes already match.
    x2d = x.reshape(M, H)
    if (Mp, Hp) != (M, H):
        x2d = jnp.pad(x2d, ((0, Mp - M), (0, Hp - H)))
    x2d = x2d.astype(cdt)
    w1p = (w1 if (Hp, Pp) == (H, P) else jnp.pad(w1, ((0, Hp - H), (0, Pp - P)))).astype(cdt)
    w2p = (w2 if (Pp, Hp) == (P, H) else jnp.pad(w2, ((0, Pp - P), (0, Hp - H)))).astype(cdt)
    b1p = (b1 if Pp == P else jnp.pad(b1, (0, Pp - P))).reshape(1, Pp).astype(jnp.float32)
    b2p = (b2 if Hp == H else jnp.pad(b2, (0, Hp - H))).reshape(1, Hp).astype(jnp.float32)

    vmem_limit = int(min(max(_vmem_need_bytes(tm, Hp, tp, ib, ob), 32 << 20), cap))
    out2d = _build_ffn_call(Mp, Hp, Pp, tm, tp, out_dtype, vmem_limit)(
        x2d, w1p, b1p, w2p, b2p)

    if (Mp, Hp) != (M, H):
        out2d = out2d[:M, :H]
    return out2d.reshape(B, S, H)


if __name__ == "__main__":
    # Small shapes consistent with the module's forward:
    # x: (batch=2, seq=8, hid_dim=32), pf_dim=64
    batch, seq, hid_dim, pf_dim = 2, 8, 32, 64

    key = jax.random.PRNGKey(0)
    kx, kw1, kb1, kw2, kb2 = jax.random.split(key, 5)

    x = jax.random.normal(kx, (batch, seq, hid_dim), dtype=jnp.float32)

    # Parameters matching nn.Conv1d shapes:
    #   fc_1.weight: (pf_dim, hid_dim, 1) -> W1 = weight[:, :, 0].T : (hid, pf)
    #   fc_2.weight: (hid_dim, pf_dim, 1) -> W2 = weight[:, :, 0].T : (pf, hid)
    w1 = jax.random.normal(kw1, (hid_dim, pf_dim), dtype=jnp.float32) * 0.1
    b1 = jax.random.normal(kb1, (pf_dim,), dtype=jnp.float32) * 0.1
    w2 = jax.random.normal(kw2, (pf_dim, hid_dim), dtype=jnp.float32) * 0.1
    b2 = jax.random.normal(kb2, (hid_dim,), dtype=jnp.float32) * 0.1

    # Pure-JAX reference of the same semantics (eval-mode dropout == identity).
    ref = jnp.maximum(x @ w1 + b1, 0.0) @ w2 + b2

    # Full-f32 path: tight check.
    out_f32 = jax.block_until_ready(
        positionwise_feedforward(x, w1, b1, w2, b2, compute_dtype=jnp.float32))
    assert out_f32.shape == (batch, seq, hid_dim)
    assert jnp.allclose(out_f32, ref, atol=1e-4, rtol=1e-4)

    # Default path: bf16 matmul inputs / f32 accumulation (MXU fast path).
    out = jax.block_until_ready(positionwise_feedforward(x, w1, b1, w2, b2))
    assert out.shape == (batch, seq, hid_dim)
    assert jnp.allclose(out, ref, atol=5e-2, rtol=5e-2)

    print("KERNEL_OK")
</pallas_src>

<mosaic_0001>
module attributes {stable_mosaic.version = 11 : i64} {
  func.func @ffn_kernel(%arg0: i32, %arg1: i32, %arg2: memref<8x128xf32, #tpu.memory_space<vmem>>, %arg3: memref<128x128xf32, #tpu.memory_space<vmem>>, %arg4: memref<1x128xf32, #tpu.memory_space<vmem>>, %arg5: memref<128x128xf32, #tpu.memory_space<vmem>>, %arg6: memref<1x128xf32, #tpu.memory_space<vmem>>, %arg7: memref<8x128xf32, #tpu.memory_space<vmem>>, %arg8: memref<8x128xf32, #tpu.memory_space<vmem>>) attributes {dimension_semantics = [#tpu.dimension_semantics<parallel>, #tpu.dimension_semantics<arbitrary>], iteration_bounds = array<i64: 2, 1>, scalar_prefetch = 0 : i64, scratch_operands = 1 : i64, tpu.core_type = #tpu.core_type<tc>, window_params = [{transform_indices = @transform_0, window_bounds = array<i64: 8, 128>}, {transform_indices = @transform_1, window_bounds = array<i64: 128, 128>}, {transform_indices = @transform_2, window_bounds = array<i64: 1, 128>}, {transform_indices = @transform_3, window_bounds = array<i64: 128, 128>}, {pipeline_mode = #tpu.pipeline_mode<synchronous>, transform_indices = @transform_4, window_bounds = array<i64: 1, 128>}, {transform_indices = @transform_5, window_bounds = array<i64: 8, 128>}]} {
    %c0_i32 = arith.constant 0 : i32
    %0 = arith.cmpi eq, %arg1, %c0_i32 : i32
    %1 = arith.extui %0 : i1 to i32
    %c0_i32_0 = arith.constant 0 : i32
    %2 = arith.cmpi ne, %1, %c0_i32_0 : i32
    scf.if %2 {
      %cst_16 = arith.constant 0.000000e+00 : f32
      %19 = vector.broadcast %cst_16 : f32 to vector<8x128xf32>
      %c0_17 = arith.constant 0 : index
      %c0_18 = arith.constant 0 : index
      %20 = vector.load %arg8[%c0_17, %c0_18] : memref<8x128xf32, #tpu.memory_space<vmem>>, vector<8x128xf32>
      tpu.vector_store %arg8[%c0_17, %c0_18], %19 {strides = array<i32>} : memref<8x128xf32, #tpu.memory_space<vmem>>, vector<8x128xf32>,
    } else {
    }
    %c0 = arith.constant 0 : index
    %c0_1 = arith.constant 0 : index
    %3 = vector.load %arg2[%c0, %c0_1] : memref<8x128xf32, #tpu.memory_space<vmem>>, vector<8x128xf32>
    %c0_2 = arith.constant 0 : index
    %c0_3 = arith.constant 0 : index
    %4 = vector.load %arg3[%c0_2, %c0_3] : memref<128x128xf32, #tpu.memory_space<vmem>>, vector<128x128xf32>
    %cst = arith.constant dense<0.000000e+00> : vector<8x128xf32>
    %5 = tpu.matmul %3, %4, %cst {dimension_numbers = #tpu.dot_dimension_numbers<[1], [0], [0], [1], [0, 0, 1, 1], [], []>} : vector<8x128xf32>, vector<128x128xf32>, vector<8x128xf32> -> vector<8x128xf32>
    %c0_4 = arith.constant 0 : index
    %c0_5 = arith.constant 0 : index
    %6 = vector.load %arg4[%c0_4, %c0_5] : memref<1x128xf32, #tpu.memory_space<vmem>>, vector<1x128xf32>
    %7 = vector.broadcast %6 : vector<1x128xf32> to vector<8x128xf32>
    %8 = arith.addf %5, %7 : vector<8x128xf32>
    %cst_6 = arith.constant 0.000000e+00 : f32
    %9 = vector.broadcast %cst_6 : f32 to vector<8x128xf32>
    %10 = arith.maximumf %8, %9 : vector<8x128xf32>
    %c0_7 = arith.constant 0 : index
    %c0_8 = arith.constant 0 : index
    %11 = vector.load %arg8[%c0_7, %c0_8] : memref<8x128xf32, #tpu.memory_space<vmem>>, vector<8x128xf32>
    %c0_9 = arith.constant 0 : index
    %c0_10 = arith.constant 0 : index
    %12 = vector.load %arg5[%c0_9, %c0_10] : memref<128x128xf32, #tpu.memory_space<vmem>>, vector<128x128xf32>
    %cst_11 = arith.constant dense<0.000000e+00> : vector<8x128xf32>
    %13 = tpu.matmul %10, %12, %cst_11 {dimension_numbers = #tpu.dot_dimension_numbers<[1], [0], [0], [1], [0, 0, 1, 1], [], []>} : vector<8x128xf32>, vector<128x128xf32>, vector<8x128xf32> -> vector<8x128xf32>
    %14 = arith.addf %11, %13 : vector<8x128xf32>
    %c0_12 = arith.constant 0 : index
    %c0_13 = arith.constant 0 : index
    %15 = vector.load %arg8[%c0_12, %c0_13] : memref<8x128xf32, #tpu.memory_space<vmem>>, vector<8x128xf32>
    tpu.vector_store %arg8[%c0_12, %c0_13], %14 {strides = array<i32>} : memref<8x128xf32, #tpu.memory_space<vmem>>, vector<8x128xf32>,
    %c0_i32_14 = arith.constant 0 : i32
    %16 = arith.cmpi eq, %arg1, %c0_i32_14 : i32
    %17 = arith.extui %16 : i1 to i32
    %c0_i32_15 = arith.constant 0 : i32
    %18 = arith.cmpi ne, %17, %c0_i32_15 : i32
    scf.if %18 {
      %c0_16 = arith.constant 0 : index
      %c0_17 = arith.constant 0 : index
      %19 = vector.load %arg8[%c0_16, %c0_17] : memref<8x128xf32, #tpu.memory_space<vmem>>, vector<8x128xf32>
      %c0_18 = arith.constant 0 : index
      %c0_19 = arith.constant 0 : index
      %20 = vector.load %arg6[%c0_18, %c0_19] : memref<1x128xf32, #tpu.memory_space<vmem>>, vector<1x128xf32>
      %21 = vector.broadcast %20 : vector<1x128xf32> to vector<8x128xf32>
      %22 = arith.addf %19, %21 : vector<8x128xf32>
      %c0_20 = arith.constant 0 : index
      %c0_21 = arith.constant 0 : index
      %23 = vector.load %arg7[%c0_20, %c0_21] : memref<8x128xf32, #tpu.memory_space<vmem>>, vector<8x128xf32>
      tpu.vector_store %arg7[%c0_20, %c0_21], %22 {strides = array<i32>} : memref<8x128xf32, #tpu.memory_space<vmem>>, vector<8x128xf32>,
    } else {
    }
    return
  }
  func.func @transform_0(%arg0: i32, %arg1: i32) -> (i32, i32) {
    %c0_i32 = arith.constant 0 : i32
    %c0_i32_0 = arith.constant 0 : i32
    return %arg0, %c0_i32 : i32, i32
  }
  func.func @transform_1(%arg0: i32, %arg1: i32) -> (i32, i32) {
    %c0_i32 = arith.constant 0 : i32
    %c0_i32_0 = arith.constant 0 : i32
    return %c0_i32, %arg1 : i32, i32
  }
  func.func @transform_2(%arg0: i32, %arg1: i32) -> (i32, i32) {
    %c0_i32 = arith.constant 0 : i32
    %c0_i32_0 = arith.constant 0 : i32
    return %c0_i32, %arg1 : i32, i32
  }
  func.func @transform_3(%arg0: i32, %arg1: i32) -> (i32, i32) {
    %c0_i32 = arith.constant 0 : i32
    %c0_i32_0 = arith.constant 0 : i32
    return %arg1, %c0_i32 : i32, i32
  }
  func.func @transform_4(%arg0: i32, %arg1: i32) -> (i32, i32) {
    %c0_i32 = arith.constant 0 : i32
    %c0_i32_0 = arith.constant 0 : i32
    %c0_i32_1 = arith.constant 0 : i32
    return %c0_i32, %c0_i32_0 : i32, i32
  }
  func.func @transform_5(%arg0: i32, %arg1: i32) -> (i32, i32) {
    %c0_i32 = arith.constant 0 : i32
    %c0_i32_0 = arith.constant 0 : i32
    return %arg0, %c0_i32 : i32, i32
  }
}

</mosaic_0001>

<llo_original>
// kernel: tpu_custom_call.1
$region0: #{tpu_custom_call.1}
  #allocation0 [shape = 'u32[]', space=smem, size = 0x4, offset = 0x4, fixed_abs, tag = 'smem constant byte address 0x4 - core index']
  #allocation1 [shape = 'u32[72,128]{1,0:T(1,128)}', space=vmem, size = 0x9000, scoped, tag = 'internal scratch']
  #allocation2 [shape = 'f32[8,128]{1,0:T(8,128)}', space=vmem, size = 0x1000, scoped, tag = 'scratch operand']
  %s0 = inlined_call_operand.hbm [shape: f32[16,128], index: 0, kind: input, shape index: {}]
  %s1 = inlined_call_operand.hbm [shape: f32[128,128], index: 1, kind: input, shape index: {}]
  %s2 = inlined_call_operand.vmem [shape: f32[1,128], index: 2, kind: input, shape index: {}]
  %s3 = inlined_call_operand.hbm [shape: f32[128,128], index: 3, kind: input, shape index: {}]
  %s4 = inlined_call_operand.vmem [shape: f32[1,128], index: 4, kind: input, shape index: {}]
  %s5 = inlined_call_operand.hbm [shape: f32[16,128], index: 5, kind: output, shape index: {}]
  %s6 = sld [smem:[#allocation0]]
  $region73: #{tpu_custom_call.1} parent=0
    _
  %s8 = ssub.s32 1, %s6
  %s9 = scalar_select 0, %s8, %s6
  $region1: #{tpu_custom_call.1} parent=0
    #allocation3 [shape = 'u8[8192]{0}', space=vmem, size = 0x2000, scoped, tag = 'input window, operand 0']
    #allocation4 [shape = 's32[2]{0}', space=sflag, size = 0x8, scoped, tag = 'scoped memory for tpu_custom_call.1']
    #allocation5 [shape = 's32[2]{0}', space=sflag, size = 0x8, scoped, tag = 'scoped memory for tpu_custom_call.1']
    #allocation6 [shape = 'u8[65536]{0}', space=vmem, size = 0x10000, scoped, tag = 'input window, operand 1, single buffered']
    #allocation7 [shape = 's32[1]{0}', space=sflag, size = 0x4, scoped, tag = 'scoped memory for tpu_custom_call.1']
    #allocation8 [shape = 'u8[65536]{0}', space=vmem, size = 0x10000, scoped, tag = 'input window, operand 3, single buffered']
    #allocation9 [shape = 'u8[8192]{0}', space=vmem, size = 0x2000, scoped, tag = 'output window, operand 0']
    %10 = vsyncpa [#allocation4], 0
    %s11 = scalar_lea.sflag [#allocation4], 1
    %12 = vsyncpa %s11, 0
    %13 = vsyncpa [#allocation7], 0
    %14 = vsyncpa [#allocation5], 0
    %s15 = scalar_lea.sflag [#allocation5], 1
    %16 = vsyncpa %s15, 0
    loop: start=0, step=1, limit=4
    $region2: #{tpu_custom_call.1} parent=1 // loop_pre_header
      _
    $region3: #{tpu_custom_call.1} parent=1 // loop_header
      %s18 = sphi 0, %s22
      %p19 = scmp.ge.s32.totalorder %s18, 4
      %s25 = sphi 0, %s37
      %s26 = sphi 0, %s33
      %s27 = sphi 0, %s25
      %s28 = sphi 0, %s26
      %s29 = sphi 0, %s27
      %s30 = sphi 0, %s28
      %s40 = sphi 0, %s42
      %s43 = sphi 0, %s40
      %s44 = sphi 0, %s43
      %s60 = sphi 0, %s44
      %s66 = sphi 0, %s68
      %s69 = sphi 0, %s66
      %s70 = sphi 0, %s69
      %s86 = sphi 0, %s70
      %s92 = sphi 0, %s94
      %s95 = sphi 0, %s92
      %s96 = sphi 0, %s95
      %s112 = sphi 0, %s96
      %s118 = sphi 0, %s120
      %s121 = sphi 0, %s118
      %s122 = sphi 0, %s121
      %s138 = sphi 0, %s122
      %s142 = sphi 0, %s142
      %s144 = sphi 0, %s142
      %s145 = sphi 0, %s144
      %s159 = sphi 0, %s145
      %s165 = sphi 0, %s167
      %s168 = sphi 0, %s165
      %s169 = sphi 0, %s168
      %s185 = sphi 0, %s169
    $region4: #{tpu_custom_call.1} parent=1 // loop_header_branch
      %21 = sbr.rel (%p19) target = $region8
    $region5: #{tpu_custom_call.1} parent=1 // loop_body
      %s23 = ssub.s32 %s18, 1
      %s24 = ssub.s32 %s18, 2
      %s31 = sadd.s32 1, %s26
      %p32 = scmp.ge.s32.totalorder %s31, 1
      %s33 = scalar_select %p32, 0, %s31
      %s34 = sadd.s32 1, %s25
      %s35 = scalar_select %p32, %s34, %s25
      %p36 = scmp.ge.s32.totalorder %s35, 2
      %s37 = scalar_select %p36, 0, %s35
      %s38 = ssub.s32 %s25, %s37
      %p39 = scmp.eq.s32.totalorder %s38, 0
      %s41 = sadd.s32 %s40, 1
      %s42 = scalar_select %p39, %s40, %s41
      %p45 = pneg %p39
      %p46 = scmp.eq.s32.totalorder %s18, 1
      %p47 = por %p45, %p46
      %p48 = scmp.ne.s32.totalorder %s40, %s43
      %p49 = scmp.eq.s32.totalorder %s18, 0
      %p50 = por %p48, %p49
      %p51 = scmp.ne.s32.totalorder %s40, %s43
      %p52 = scmp.eq.s32.totalorder %s23, 1
      %p53 = por %p51, %p52
      %p54 = scmp.ne.s32.totalorder %s43, %s44
      %p55 = scmp.eq.s32.totalorder %s23, 0
      %p56 = por %p54, %p55
      %p57 = scmp.ne.s32.totalorder %s43, %s44
      %p58 = scmp.eq.s32.totalorder %s24, 1
      %p59 = por %p57, %p58
      %p61 = scmp.ne.s32.totalorder %s44, %s60
      %p62 = scmp.eq.s32.totalorder %s24, 0
      %p63 = por %p61, %p62
      %s64 = ssub.s32 %s26, %s33
      %p65 = scmp.eq.s32.totalorder %s64, 0
      %s67 = sadd.s32 %s66, 1
      %s68 = scalar_select %p65, %s66, %s67
      %p71 = pneg %p65
      %p72 = scmp.eq.s32.totalorder %s18, 1
      %p73 = por %p71, %p72
      %p74 = scmp.ne.s32.totalorder %s66, %s69
      %p75 = scmp.eq.s32.totalorder %s18, 0
      %p76 = por %p74, %p75
      %p77 = scmp.ne.s32.totalorder %s66, %s69
      %p78 = scmp.eq.s32.totalorder %s23, 1
      %p79 = por %p77, %p78
      %p80 = scmp.ne.s32.totalorder %s69, %s70
      %p81 = scmp.eq.s32.totalorder %s23, 0
      %p82 = por %p80, %p81
      %p83 = scmp.ne.s32.totalorder %s69, %s70
      %p84 = scmp.eq.s32.totalorder %s24, 1
      %p85 = por %p83, %p84
      %p87 = scmp.ne.s32.totalorder %s70, %s86
      %p88 = scmp.eq.s32.totalorder %s24, 0
      %p89 = por %p87, %p88
      %s90 = ssub.s32 %s26, %s33
      %p91 = scmp.eq.s32.totalorder %s90, 0
      %s93 = sadd.s32 %s92, 1
      %s94 = scalar_select %p91, %s92, %s93
      %p97 = pneg %p91
      %p98 = scmp.eq.s32.totalorder %s18, 1
      %p99 = por %p97, %p98
      %p100 = scmp.ne.s32.totalorder %s92, %s95
      %p101 = scmp.eq.s32.totalorder %s18, 0
      %p102 = por %p100, %p101
      %p103 = scmp.ne.s32.totalorder %s92, %s95
      %p104 = scmp.eq.s32.totalorder %s23, 1
      %p105 = por %p103, %p104
      %p106 = scmp.ne.s32.totalorder %s95, %s96
      %p107 = scmp.eq.s32.totalorder %s23, 0
      %p108 = por %p106, %p107
      %p109 = scmp.ne.s32.totalorder %s95, %s96
      %p110 = scmp.eq.s32.totalorder %s24, 1
      %p111 = por %p109, %p110
      %p113 = scmp.ne.s32.totalorder %s96, %s112
      %p114 = scmp.eq.s32.totalorder %s24, 0
      %p115 = por %p113, %p114
      %s116 = ssub.s32 %s26, %s33
      %p117 = scmp.eq.s32.totalorder %s116, 0
      %s119 = sadd.s32 %s118, 1
      %s120 = scalar_select %p117, %s118, %s119
      %p123 = pneg %p117
      %p124 = scmp.eq.s32.totalorder %s18, 1
      %p125 = por %p123, %p124
      %p126 = scmp.ne.s32.totalorder %s118, %s121
      %p127 = scmp.eq.s32.totalorder %s18, 0
      %p128 = por %p126, %p127
      %p129 = scmp.ne.s32.totalorder %s118, %s121
      %p130 = scmp.eq.s32.totalorder %s23, 1
      %p131 = por %p129, %p130
      %p132 = scmp.ne.s32.totalorder %s121, %s122
      %p133 = scmp.eq.s32.totalorder %s23, 0
      %p134 = por %p132, %p133
      %p135 = scmp.ne.s32.totalorder %s121, %s122
      %p136 = scmp.eq.s32.totalorder %s24, 1
      %p137 = por %p135, %p136
      %p139 = scmp.ne.s32.totalorder %s122, %s138
      %p140 = scmp.eq.s32.totalorder %s24, 0
      %p141 = por %p139, %p140
      %s143 = sadd.s32 %s142, 1
      %p146 = scmp.eq.s32.totalorder %s18, 1
      %p147 = scmp.ne.s32.totalorder %s142, %s144
      %p148 = scmp.eq.s32.totalorder %s18, 0
      %p149 = por %p147, %p148
      %p150 = scmp.ne.s32.totalorder %s142, %s144
      %p151 = scmp.eq.s32.totalorder %s23, 1
      %p152 = por %p150, %p151
      %p153 = scmp.ne.s32.totalorder %s144, %s145
      %p154 = scmp.eq.s32.totalorder %s23, 0
      %p155 = por %p153, %p154
      %p156 = scmp.ne.s32.totalorder %s144, %s145
      %p157 = scmp.eq.s32.totalorder %s24, 1
      %p158 = por %p156, %p157
      %p160 = scmp.ne.s32.totalorder %s145, %s159
      %p161 = scmp.eq.s32.totalorder %s24, 0
      %p162 = por %p160, %p161
      %s163 = ssub.s32 %s25, %s37
      %p164 = scmp.eq.s32.totalorder %s163, 0
      %s166 = sadd.s32 %s165, 1
      %s167 = scalar_select %p164, %s165, %s166
      %p170 = pneg %p164
      %p171 = scmp.eq.s32.totalorder %s18, 1
      %p172 = por %p170, %p171
      %p173 = scmp.ne.s32.totalorder %s165, %s168
      %p174 = scmp.eq.s32.totalorder %s18, 0
      %p175 = por %p173, %p174
      %p176 = scmp.ne.s32.totalorder %s165, %s168
      %p177 = scmp.eq.s32.totalorder %s23, 1
      %p178 = por %p176, %p177
      %p179 = scmp.ne.s32.totalorder %s168, %s169
      %p180 = scmp.eq.s32.totalorder %s23, 0
      %p181 = por %p179, %p180
      %p182 = scmp.ne.s32.totalorder %s168, %s169
      %p183 = scmp.eq.s32.totalorder %s24, 1
      %p184 = por %p182, %p183
      %p186 = scmp.ne.s32.totalorder %s169, %s185
      %p187 = scmp.eq.s32.totalorder %s24, 0
      %p188 = por %p186, %p187
      %p189 = scmp.le.s32.totalorder 1, %s18
      %p190 = scmp.lt.s32.totalorder %s18, 3
      %p191 = pnand %p189, %p190
      %p192 = pneg %p191
      // Predicated region
      $region9: #{tpu_custom_call.1} parent=5 // pred_check
        _
      $region10: #{tpu_custom_call.1} parent=5 // pred_check_branch
        %194 = sbr.rel (%p191) target = $region12
      $region11: #{tpu_custom_call.1} parent=5 // pred_region
        %s195 = ssub.s32 %s18, 1
        // Predicated region
        $region13: #{tpu_custom_call.1} parent=11 // pred_check
          %p196 = pneg %p82
        $region14: #{tpu_custom_call.1} parent=11 // pred_check_branch
          %198 = sbr.rel (%p196) target = $region16
        $region15: #{tpu_custom_call.1} parent=11 // pred_region
          %200 = vsyncadd [#allocation7], 0
          %s201 = smul.addr %s28, 8
          %s202 = scalar_lea.hbm %s1, %s201
          %s203 = sshll.u32 %s202, 4
          %s204 = int_to_ptr.hbm [resolvable:$true] %s203
          %s205 = sshll.u32 [#allocation6], 4
          %s206 = int_to_ptr.vmem [resolvable:$true] %s205
          %211 = dma.hbm_to_vmem [thread:$0]  %s204, 2048, %s206, [#allocation7], 128, 128, 8
        $region16: #{tpu_custom_call.1} parent=11 // pred_fallthru
          _
        // Predicated region
        $region17: #{tpu_custom_call.1} parent=11 // pred_check
          %p212 = pneg %p108
        $region18: #{tpu_custom_call.1} parent=11 // pred_check_branch
          %214 = sbr.rel (%p212) target = $region20
        $region19: #{tpu_custom_call.1} parent=11 // pred_region
          %p215 = scmp.lt.s32.totalorder %s28, 0
          %s216 = scalar_select %p215, %s28, 0
          %s217 = scalar_lea.vmem %s2, %s216
        $region20: #{tpu_custom_call.1} parent=11 // pred_fallthru
          _
        // Predicated region
        $region21: #{tpu_custom_call.1} parent=11 // pred_check
          %p218 = pneg %p134
        $region22: #{tpu_custom_call.1} parent=11 // pred_check_branch
          %220 = sbr.rel (%p218) target = $region24
        $region23: #{tpu_custom_call.1} parent=11 // pred_region
          %s221 = smul.u32 16, %s28
          %223 = vsyncadd [#allocation7], 0
          %s224 = smul.addr %s221, 8
          %s225 = scalar_lea.hbm %s3, %s224
          %s226 = sshll.u32 %s225, 4
          %s227 = int_to_ptr.hbm [resolvable:$true] %s226
          %s228 = sshll.u32 [#allocation8], 4
          %s229 = int_to_ptr.vmem [resolvable:$true] %s228
          %234 = dma.hbm_to_vmem [thread:$0]  %s227, 2048, %s229, [#allocation7], 128, 128, 8
        $region24: #{tpu_custom_call.1} parent=11 // pred_fallthru
          _
        // Predicated region
        $region25: #{tpu_custom_call.1} parent=11 // pred_check
          %p235 = pneg %p155
        $region26: #{tpu_custom_call.1} parent=11 // pred_check_branch
          %237 = sbr.rel (%p235) target = $region28
        $region27: #{tpu_custom_call.1} parent=11 // pred_region
          _
        $region28: #{tpu_custom_call.1} parent=11 // pred_fallthru
          _
      $region12: #{tpu_custom_call.1} parent=5 // pred_fallthru
        _
      %p238 = scmp.lt.s32.totalorder %s18, 2
      // Predicated region
      $region29: #{tpu_custom_call.1} parent=5 // pred_check
        %p239 = pneg %p238
      $region30: #{tpu_custom_call.1} parent=5 // pred_check_branch
        %241 = sbr.rel (%p239) target = $region32
      $region31: #{tpu_custom_call.1} parent=5 // pred_region
        // Predicated region
        $region33: #{tpu_custom_call.1} parent=31 // pred_check
          %p242 = pneg %p50
        $region34: #{tpu_custom_call.1} parent=31 // pred_check_branch
          %244 = sbr.rel (%p242) target = $region36
        $region35: #{tpu_custom_call.1} parent=31 // pred_region
          %s245 = sand.u32 %s40, 1
          %s246 = scalar_lea.sflag [#allocation4], %s245
          %s247 = sand.u32 %s40, 1
          %s248 = smul.addr %s247, 8
          %s249 = scalar_lea.vmem [#allocation3], %s248
          %251 = vsyncadd %s246, 0
          %s252 = smul.addr %s25, 8
          %s253 = scalar_lea.hbm %s0, %s252
          %s255 = sshll.u32 %s253, 4
          %s256 = int_to_ptr.hbm [resolvable:$true] %s255
          %s257 = sshll.u32 %s249, 4
          %s258 = int_to_ptr.vmem [resolvable:$true] %s257
          %260 = dma.hbm_to_vmem [thread:$0]  %s256, 128, %s258, %s246
        $region36: #{tpu_custom_call.1} parent=31 // pred_fallthru
          _
      $region32: #{tpu_custom_call.1} parent=5 // pred_fallthru
        _
      %p261 = scmp.le.s32.totalorder 1, %s18
      %p262 = scmp.lt.s32.totalorder %s18, 3
      %p263 = pnand %p261, %p262
      %p264 = pneg %p263
      // Predicated region
      $region37: #{tpu_custom_call.1} parent=5 // pred_check
        _
      $region38: #{tpu_custom_call.1} parent=5 // pred_check_branch
        %266 = sbr.rel (%p263) target = $region40
      $region39: #{tpu_custom_call.1} parent=5 // pred_region
        %s267 = ssub.s32 %s18, 1
        %s268 = sand.u32 %s43, 1
        %s269 = scalar_lea.sflag [#allocation4], %s268
        %s270 = sand.u32 %s43, 1
        %s271 = smul.addr %s270, 8
        %s272 = scalar_lea.vmem [#allocation3], %s271
        // Predicated region
        $region41: #{tpu_custom_call.1} parent=39 // pred_check
          %p273 = pneg %p56
        $region42: #{tpu_custom_call.1} parent=39 // pred_check_branch
          %275 = sbr.rel (%p273) target = $region44
        $region43: #{tpu_custom_call.1} parent=39 // pred_region
          %277 = dma.done %s269, 128
        $region44: #{tpu_custom_call.1} parent=39 // pred_fallthru
          _
        // Predicated region
        $region45: #{tpu_custom_call.1} parent=39 // pred_check
          %p278 = pneg %p82
        $region46: #{tpu_custom_call.1} parent=39 // pred_check_branch
          %280 = sbr.rel (%p278) target = $region48
        $region47: #{tpu_custom_call.1} parent=39 // pred_region
          %282 = dma.done [#allocation7], 2048
        $region48: #{tpu_custom_call.1} parent=39 // pred_fallthru
          _
        // Predicated region
        $region49: #{tpu_custom_call.1} parent=39 // pred_check
          %p283 = pneg %p134
        $region50: #{tpu_custom_call.1} parent=39 // pred_check_branch
          %285 = sbr.rel (%p283) target = $region52
        $region51: #{tpu_custom_call.1} parent=39 // pred_region
          %287 = dma.done [#allocation7], 2048
        $region52: #{tpu_custom_call.1} parent=39 // pred_fallthru
          _
        %s288 = sand.u32 %s43, 1
        %s289 = scalar_lea.sflag [#allocation4], %s288
        %s290 = sand.u32 %s43, 1
        %s291 = smul.addr %s290, 8
        %s292 = scalar_lea.vmem [#allocation3], %s291
        %p293 = pneg %p56
        %p294 = pneg %p53
        %p295 = pneg %p82
        %p296 = pneg %p79
        %p297 = scmp.lt.s32.totalorder %s28, 0
        %s298 = scalar_select %p297, %s28, 0
        %s299 = scalar_lea.vmem %s2, %s298
        %p300 = pneg %p108
        %p301 = pneg %p105
        %p302 = pneg %p134
        %p303 = pneg %p131
        %p304 = pneg %p155
        %p305 = pneg %p152
        %p306 = pneg %p181
        %p307 = pneg %p178
        %s308 = sand.u32 %s168, 1
        %s309 = scalar_lea.sflag [#allocation5], %s308
        %s310 = sand.u32 %s168, 1
        %s311 = smul.addr %s310, 8
        %s312 = scalar_lea.vmem [#allocation9], %s311
        %p313 = scmp.lt.s32.totalorder %s28, 0
        %s314 = scalar_select %p313, %s28, 0
        %s315 = scalar_lea.vmem %s2, %s314
        %s316 = smul.u32 16, %s28
        %p317 = scmp.eq.s32.totalorder %s28, 0
        // Predicated region
        $region53: #{tpu_custom_call.1} parent=39 // pred_check
          %p318 = pneg %p317
        $region54: #{tpu_custom_call.1} parent=39 // pred_check_branch
          %320 = sbr.rel (%p318) target = $region56
        $region55: #{tpu_custom_call.1} parent=39 // pred_region
          %321 = vst [vmem:[#allocation2] sm:$0xff] 0.0
        $region56: #{tpu_custom_call.1} parent=39 // pred_fallthru
          _
        %v322 = vld [vmem:[%s272] sm:$0xff]
        %v323 = vld [vmem:[#allocation6] sm:$0xff]
        %v324 = vld [vmem:[#allocation6 + $0x8] sm:$0xff]
        %v325 = vld [vmem:[#allocation6 + $0x10] sm:$0xff]
        %v326 = vld [vmem:[#allocation6 + $0x18] sm:$0xff]
        %v327 = vld [vmem:[#allocation6 + $0x20] sm:$0xff]
        %v328 = vld [vmem:[#allocation6 + $0x28] sm:$0xff]
        %v329 = vld [vmem:[#allocation6 + $0x30] sm:$0xff]
        %v330 = vld [vmem:[#allocation6 + $0x38] sm:$0xff]
        %v331 = vld [vmem:[#allocation6 + $0x40] sm:$0xff]
        %v332 = vld [vmem:[#allocation6 + $0x48] sm:$0xff]
        %v333 = vld [vmem:[#allocation6 + $0x50] sm:$0xff]
        %v334 = vld [vmem:[#allocation6 + $0x58] sm:$0xff]
        %v335 = vld [vmem:[#allocation6 + $0x60] sm:$0xff]
        %v336 = vld [vmem:[#allocation6 + $0x68] sm:$0xff]
        %v337 = vld [vmem:[#allocation6 + $0x70] sm:$0xff]
        %v338 = vld [vmem:[#allocation6 + $0x78] sm:$0xff]
        %v339 = vld [vmem:[%s315] sm:$0x1]
        %v341 = vperm.slane %v339, 0
        %343 = vmatpush.msra.mxu0 %v338
        %344 = vmatpush.msra.mxu0 %v337
        %345 = vmatpush.msra.mxu0 %v336
        %346 = vmatpush.msra.mxu0 %v335
        %347 = vmatpush.msra.mxu0 %v334
        %348 = vmatpush.msra.mxu0 %v333
        %349 = vmatpush.msra.mxu0 %v332
        %350 = vmatpush.msra.mxu0 %v331
        %351 = vmatpush.msra.mxu0 %v330
        %352 = vmatpush.msra.mxu0 %v329
        %353 = vmatpush.msra.mxu0 %v328
        %354 = vmatpush.msra.mxu0 %v327
        %355 = vmatpush.msra.mxu0 %v326
        %356 = vmatpush.msra.mxu0 %v325
        %357 = vmatpush.msra.mxu0 %v324
        %358 = vmatpush.msra.mxu0 %v323
        %359 = vmatmul.f32.gmra.mxu0 %v322
        %v360 = vpop.f32.mrf.mxu0
        %v361 = vadd.f32 %v341, %v360
        %362 = vdwg.mxu0
        %v363 = vmax.f32 %v361, 0.0
        %v364 = vld [vmem:[#allocation2] sm:$0xff]
        %v365 = vld [vmem:[#allocation8] sm:$0xff]
        %v366 = vld [vmem:[#allocation8 + $0x8] sm:$0xff]
        %v367 = vld [vmem:[#allocation8 + $0x10] sm:$0xff]
        %v368 = vld [vmem:[#allocation8 + $0x18] sm:$0xff]
        %v369 = vld [vmem:[#allocation8 + $0x20] sm:$0xff]
        %v370 = vld [vmem:[#allocation8 + $0x28] sm:$0xff]
        %v371 = vld [vmem:[#allocation8 + $0x30] sm:$0xff]
        %v372 = vld [vmem:[#allocation8 + $0x38] sm:$0xff]
        %v373 = vld [vmem:[#allocation8 + $0x40] sm:$0xff]
        %v374 = vld [vmem:[#allocation8 + $0x48] sm:$0xff]
        %v375 = vld [vmem:[#allocation8 + $0x50] sm:$0xff]
        %v376 = vld [vmem:[#allocation8 + $0x58] sm:$0xff]
        %v377 = vld [vmem:[#allocation8 + $0x60] sm:$0xff]
        %v378 = vld [vmem:[#allocation8 + $0x68] sm:$0xff]
        %v379 = vld [vmem:[#allocation8 + $0x70] sm:$0xff]
        %v380 = vld [vmem:[#allocation8 + $0x78] sm:$0xff]
        %381 = vmatpush.msra.mxu0 %v380
        %382 = vmatpush.msra.mxu0 %v379
        %383 = vmatpush.msra.mxu0 %v378
        %384 = vmatpush.msra.mxu0 %v377
        %385 = vmatpush.msra.mxu0 %v376
        %386 = vmatpush.msra.mxu0 %v375
        %387 = vmatpush.msra.mxu0 %v374
        %388 = vmatpush.msra.mxu0 %v373
        %389 = vmatpush.msra.mxu0 %v372
        %390 = vmatpush.msra.mxu0 %v371
        %391 = vmatpush.msra.mxu0 %v370
        %392 = vmatpush.msra.mxu0 %v369
        %393 = vmatpush.msra.mxu0 %v368
        %394 = vmatpush.msra.mxu0 %v367
        %395 = vmatpush.msra.mxu0 %v366
        %396 = vmatpush.msra.mxu0 %v365
        %397 = vmatmul.f32.gmra.mxu0 %v363
        %v398 = vpop.f32.mrf.mxu0
        %v399 = vadd.f32 0.0, %v398
        %400 = vdwg.mxu0
        %v401 = vadd.f32 %v364, %v399
        %402 = vst [vmem:[#allocation2] sm:$0xff] %v401
        // Predicated region
        $region57: #{tpu_custom_call.1} parent=39 // pred_check
          %p403 = pneg %p317
        $region58: #{tpu_custom_call.1} parent=39 // pred_check_branch
          %405 = sbr.rel (%p403) target = $region60
        $region59: #{tpu_custom_call.1} parent=39 // pred_region
          %v406 = vld [vmem:[#allocation2] sm:$0xff]
          %v407 = vld [vmem:[%s4] sm:$0x1]
          %v409 = vperm.slane %v407, 0
          %v411 = vadd.f32 %v406, %v409
          %412 = vst [vmem:[%s312] sm:$0xff] %v411
        $region60: #{tpu_custom_call.1} parent=39 // pred_fallthru
          _
        %s413 = sand.u32 %s168, 1
        %s414 = scalar_lea.sflag [#allocation5], %s413
        %s415 = sand.u32 %s168, 1
        %s416 = smul.addr %s415, 8
        %s417 = scalar_lea.vmem [#allocation9], %s416
        // Predicated region
        $region61: #{tpu_custom_call.1} parent=39 // pred_check
          %p418 = pneg %p178
        $region62: #{tpu_custom_call.1} parent=39 // pred_check_branch
          %420 = sbr.rel (%p418) target = $region64
        $region63: #{tpu_custom_call.1} parent=39 // pred_region
          %422 = vsyncadd %s414, 0
          %s423 = smul.addr %s27, 8
          %s424 = scalar_lea.hbm %s5, %s423
          %s426 = sshll.u32 %s417, 4
          %s427 = int_to_ptr.vmem [resolvable:$true] %s426
          %s428 = sshll.u32 %s424, 4
          %s429 = int_to_ptr.hbm [resolvable:$true] %s428
          %431 = dma.vmem_to_hbm [thread:$0]  %s427, 128, %s429, %s414
        $region64: #{tpu_custom_call.1} parent=39 // pred_fallthru
          _
      $region40: #{tpu_custom_call.1} parent=5 // pred_fallthru
        _
      %p432 = scmp.le.s32.totalorder 2, %s18
      // Predicated region
      $region65: #{tpu_custom_call.1} parent=5 // pred_check
        %p433 = pneg %p432
      $region66: #{tpu_custom_call.1} parent=5 // pred_check_branch
        %435 = sbr.rel (%p433) target = $region68
      $region67: #{tpu_custom_call.1} parent=5 // pred_region
        %s436 = ssub.s32 %s18, 2
        // Predicated region
        $region69: #{tpu_custom_call.1} parent=67 // pred_check
          %p437 = pneg %p184
        $region70: #{tpu_custom_call.1} parent=67 // pred_check_branch
          %439 = sbr.rel (%p437) target = $region72
        $region71: #{tpu_custom_call.1} parent=67 // pred_region
          %s440 = sand.u32 %s169, 1
          %s441 = scalar_lea.sflag [#allocation5], %s440
          %s442 = sand.u32 %s169, 1
          %s443 = smul.addr %s442, 8
          %s444 = scalar_lea.vmem [#allocation9], %s443
          %446 = dma.done %s441, 128
        $region72: #{tpu_custom_call.1} parent=67 // pred_fallthru
          _
      $region68: #{tpu_custom_call.1} parent=5 // pred_fallthru
        _
    $region6: #{tpu_custom_call.1} parent=1 // loop_footer
      %s22 = sadd.s32 1, %s18
    $region7: #{tpu_custom_call.1} parent=1 // loop_footer_branch
      %17 = sbr.rel target = $region3
    $region8: #{tpu_custom_call.1} parent=1 // loop_exit
      _
    %447 = vsyncpa [#allocation4], 1
    %s448 = scalar_lea.sflag [#allocation4], 1
    %449 = vsyncpa %s448, 1
    %450 = vsyncpa [#allocation7], 1
    %451 = vsyncpa [#allocation5], 1
    %s452 = scalar_lea.sflag [#allocation5], 1
    %453 = vsyncpa %s452, 1

</llo_original>
